<compile_context>
chip_gen: v5e
topology: v5e:2x2
jax: 0.10.0
libtpu: 0.0.40
codegen_flags: <defaults>
</compile_context>

<pallas_src>
import math
import functools

import jax
import jax.numpy as jnp
from jax.experimental import pallas as pl
from jax.experimental.pallas import tpu as pltpu


def _hash_u32(h):
    """lowbias32-style uint32 finalizer (good avalanche), pure VPU ops."""
    h = h ^ (h >> 16)
    h = h * jnp.uint32(0x7FEB352D)
    h = h ^ (h >> 15)
    h = h * jnp.uint32(0x846CA68B)
    h = h ^ (h >> 16)
    return h


def _pe_dropout_kernel(seed_ref, x_ref, pe_ref, o_ref, *, p, apply_dropout):
    # seed_ref: SMEM int32[1] (scalar prefetch)
    # x_ref / pe_ref / o_ref: VMEM (TR, D) row tiles of the flattened (B*L, D) problem
    y = x_ref[...] + pe_ref[...]                              # fused elementwise add
    if apply_dropout:
        rows, cols = y.shape
        # Counter-based stateless PRNG: unique uint32 counter per element,
        # mixed with the seed, hashed.  Works on TPU hardware and interpret mode.
        base = (pl.program_id(0) * rows).astype(jnp.uint32)   # global row offset
        row_ids = jax.lax.broadcasted_iota(jnp.int32, (rows, cols), 0).astype(jnp.uint32)
        col_ids = jax.lax.broadcasted_iota(jnp.int32, (rows, cols), 1).astype(jnp.uint32)
        idx = (base + row_ids) * jnp.uint32(cols) + col_ids
        seed = seed_ref[0].astype(jnp.uint32)
        bits = _hash_u32(idx + seed * jnp.uint32(0x9E3779B9))
        # Keep-test directly in the uint32 domain: P(keep) = 1 - p.
        thr = jnp.uint32(min(int(p * 4294967296.0), 4294967295))
        keep = bits >= thr
        inv_keep = 1.0 / (1.0 - p)
        y = jnp.where(keep, y * inv_keep, jnp.zeros_like(y))
    o_ref[...] = y.astype(o_ref.dtype)


def make_pe_table(d_model: int, max_len: int = 4) -> jnp.ndarray:
    """Deterministic sinusoidal table, same math as the PyTorch __init__."""
    position = jnp.arange(0, max_len, dtype=jnp.float32)[:, None]          # (L, 1)
    div_term = jnp.exp(
        jnp.arange(0, d_model, 2, dtype=jnp.float32)
        * (-(math.log(10000.0) / d_model))
    )                                                                      # (D/2,)
    pe = jnp.zeros((max_len, d_model), dtype=jnp.float32)
    pe = pe.at[:, 0::2].set(jnp.sin(position * div_term))
    pe = pe.at[:, 1::2].set(jnp.cos(position * div_term))
    return pe[None]                                                        # (1, L, D)


def _pick_row_tile(rows: int, d: int, itemsize: int, target_bytes: int = 2 << 20) -> int:
    """Largest row tile that (a) divides rows, (b) is a multiple of 8,
    (c) keeps one block ref <= ~target_bytes.  Falls back to the full extent
    when rows is not a multiple of 8 (full-array blocks are always legal)."""
    if rows % 8 != 0:
        return rows
    max_tr = max(8, (target_bytes // max(1, d * itemsize)) // 8 * 8)
    tr = min(rows, max_tr, 1024)
    tr = max(8, tr - (tr % 8))
    while rows % tr != 0:
        tr -= 8
    return tr


def positional_encoding_forward(x, pe, *, p=0.1, training=True, seed=0):
    """x: (B, L, D); pe: (1, max_len, D). Returns (B, L, D)."""
    B, L, D = x.shape
    if training and p >= 1.0:
        return jnp.zeros_like(x)          # degenerate dropout(p=1)
    apply_dropout = bool(training and p > 0.0)

    # Flatten (B, L) -> rows: big lane-dense tiles instead of one tiny (L, D)
    # tile per batch (per-grid-step overhead dominated the previous version).
    rows = B * L
    x2 = x.reshape(rows, D)
    # pe is tiny (max_len rows); broadcast once in the wrapper so the kernel's
    # hot path is a single add with both operands resident in VMEM.
    pe2 = jnp.broadcast_to(pe[:, :L, :], (B, L, D)).reshape(rows, D).astype(x.dtype)

    tr = _pick_row_tile(rows, D, x.dtype.itemsize)
    grid = (rows // tr,)

    kernel = functools.partial(
        _pe_dropout_kernel, p=float(p), apply_dropout=apply_dropout
    )
    seed_arr = jnp.asarray([seed], dtype=jnp.int32)

    out2 = pl.pallas_call(
        kernel,
        out_shape=jax.ShapeDtypeStruct((rows, D), x.dtype),
        grid_spec=pltpu.PrefetchScalarGridSpec(
            num_scalar_prefetch=1,
            grid=grid,
            in_specs=[
                pl.BlockSpec((tr, D), lambda r, seed_ref: (r, 0)),
                pl.BlockSpec((tr, D), lambda r, seed_ref: (r, 0)),
            ],
            out_specs=pl.BlockSpec((tr, D), lambda r, seed_ref: (r, 0)),
        ),
        compiler_params=pltpu.CompilerParams(
            # Blocks are independent (counter-based per-element RNG), so let
            # Mosaic shard the grid across both TensorCores on v7x.
            dimension_semantics=("parallel",),
            vmem_limit_bytes=32 * 1024 * 1024,
        ),
    )(seed_arr, x2, pe2)
    return out2.reshape(B, L, D)


if __name__ == "__main__":
    # Small shapes consistent with the module: d_model=128, max_len=4.
    B, L, D = 2, 4, 128
    p = 0.1

    key = jax.random.PRNGKey(0)
    x = jax.random.normal(key, (B, L, D), dtype=jnp.float32)
    pe = make_pe_table(D, max_len=4)

    # Eval-mode (dropout is identity) -- exact match against plain-JAX reference.
    out_eval = positional_encoding_forward(x, pe, p=p, training=False)
    out_eval = jax.block_until_ready(out_eval)
    ref = x + pe[:, :L, :]
    assert out_eval.shape == (B, L, D)
    assert jnp.allclose(out_eval, ref, atol=1e-6, rtol=1e-6)

    # Train-mode (dropout active): every element is either 0 or the eval value
    # scaled by 1/(1-p), and both dropped and kept elements occur.
    out_train = positional_encoding_forward(x, pe, p=p, training=True, seed=1234)
    out_train = jax.block_until_ready(out_train)
    scaled = ref / (1.0 - p)
    is_zero = jnp.isclose(out_train, 0.0, atol=1e-6)
    is_scaled = jnp.isclose(out_train, scaled, atol=1e-5, rtol=1e-5)
    assert bool(jnp.all(is_zero | is_scaled))
    assert bool(jnp.any(out_train == 0.0))        # some elements dropped
    assert bool(jnp.any(out_train != 0.0))        # some elements kept

    print("KERNEL_OK")
</pallas_src>

<mosaic_0001>
module attributes {stable_mosaic.version = 11 : i64} {
  func.func @_pe_dropout_kernel(%arg0: i32, %arg1: memref<1xi32, #tpu.memory_space<smem>>, %arg2: memref<8x128xf32, #tpu.memory_space<vmem>>, %arg3: memref<8x128xf32, #tpu.memory_space<vmem>>, %arg4: memref<8x128xf32, #tpu.memory_space<vmem>>) attributes {dimension_semantics = [#tpu.dimension_semantics<parallel>], iteration_bounds = array<i64: 1>, scalar_prefetch = 1 : i64, scratch_operands = 0 : i64, tpu.core_type = #tpu.core_type<tc>, window_params = [{transform_indices = @transform_0, window_bounds = array<i64: 8, 128>}, {transform_indices = @transform_1, window_bounds = array<i64: 8, 128>}, {transform_indices = @transform_2, window_bounds = array<i64: 8, 128>}]} {
    %c0 = arith.constant 0 : index
    %c0_0 = arith.constant 0 : index
    %0 = vector.load %arg2[%c0, %c0_0] : memref<8x128xf32, #tpu.memory_space<vmem>>, vector<8x128xf32>
    %c0_1 = arith.constant 0 : index
    %c0_2 = arith.constant 0 : index
    %1 = vector.load %arg3[%c0_1, %c0_2] : memref<8x128xf32, #tpu.memory_space<vmem>>, vector<8x128xf32>
    %2 = arith.addf %0, %1 : vector<8x128xf32>
    %c0_3 = arith.constant 0 : index
    %c0_4 = arith.constant 0 : index
    %3 = vector.load %arg4[%c0_3, %c0_4] : memref<8x128xf32, #tpu.memory_space<vmem>>, vector<8x128xf32>
    tpu.vector_store %arg4[%c0_3, %c0_4], %2 {strides = array<i32>} : memref<8x128xf32, #tpu.memory_space<vmem>>, vector<8x128xf32>,
    return
  }
  func.func @transform_0(%arg0: i32, %arg1: memref<1xi32, #tpu.memory_space<smem>>) -> (i32, i32) {
    %c0_i32 = arith.constant 0 : i32
    %c0_i32_0 = arith.constant 0 : i32
    return %arg0, %c0_i32 : i32, i32
  }
  func.func @transform_1(%arg0: i32, %arg1: memref<1xi32, #tpu.memory_space<smem>>) -> (i32, i32) {
    %c0_i32 = arith.constant 0 : i32
    %c0_i32_0 = arith.constant 0 : i32
    return %arg0, %c0_i32 : i32, i32
  }
  func.func @transform_2(%arg0: i32, %arg1: memref<1xi32, #tpu.memory_space<smem>>) -> (i32, i32) {
    %c0_i32 = arith.constant 0 : i32
    %c0_i32_0 = arith.constant 0 : i32
    return %arg0, %c0_i32 : i32, i32
  }
}

</mosaic_0001>

<llo_original>
// kernel: tpu_custom_call.1
$region0: #{tpu_custom_call.1}
  #allocation0 [shape = 'u32[]', space=smem, size = 0x4, offset = 0x4, fixed_abs, tag = 'smem constant byte address 0x4 - core index']
  #allocation1 [shape = 'u32[72,128]{1,0:T(1,128)}', space=vmem, size = 0x9000, scoped, tag = 'internal scratch']
  #allocation2 [shape = 's32[1]{0}', space=sflag, size = 0x4, scoped, tag = 'scoped memory for tpu_custom_call.1']
  #allocation3 [shape = 's32[1]{0:T(128)S(6)}', space=smem, size = 0x200, scoped, tag = 'prefetched SMEM operand 0']
  %s0 = inlined_call_operand.<no memory space> [shape: s32[1], index: 0, kind: input, shape index: {}]
  %s1 = inlined_call_operand.hbm [shape: f32[8,128], index: 1, kind: input, shape index: {}]
  %s2 = inlined_call_operand.hbm [shape: f32[8,128], index: 2, kind: input, shape index: {}]
  %s3 = inlined_call_operand.hbm [shape: f32[8,128], index: 3, kind: output, shape index: {}]
  %s4 = sld [smem:[#allocation0]]
  $region26: #{tpu_custom_call.1} parent=0
    _
  %s6 = ssub.s32 1, %s4
  %s7 = scalar_select 0, %s6, %s4
  %8 = sst [smem:[#allocation3]] %s0
  $region1: #{tpu_custom_call.1} parent=0
    #allocation4 [shape = 'u8[4096]{0}', space=vmem, size = 0x1000, scoped, tag = 'input window, operand 1, single buffered']
    #allocation5 [shape = 's32[1]{0}', space=sflag, size = 0x4, scoped, tag = 'scoped memory for tpu_custom_call.1']
    #allocation6 [shape = 's32[1]{0}', space=sflag, size = 0x4, scoped, tag = 'scoped memory for tpu_custom_call.1']
    #allocation7 [shape = 'u8[4096]{0}', space=vmem, size = 0x1000, scoped, tag = 'input window, operand 2, single buffered']
    #allocation8 [shape = 's32[1]{0}', space=sflag, size = 0x4, scoped, tag = 'scoped memory for tpu_custom_call.1']
    #allocation9 [shape = 'u8[4096]{0}', space=vmem, size = 0x1000, scoped, tag = 'output window, operand 0, single buffered']
    %9 = vsyncpa [#allocation5], 0
    %10 = vsyncpa [#allocation8], 0
    %11 = vsyncpa [#allocation6], 0
    // Predicated region
    $region2: #{tpu_custom_call.1} parent=1 // pred_check
      _
    $region3: #{tpu_custom_call.1} parent=1 // pred_check_branch
      %13 = sbr.rel (0) target = $region5
    $region4: #{tpu_custom_call.1} parent=1 // pred_region
      %15 = vsyncadd [#allocation5], 0
      %s17 = sshll.u32 %s1, 4
      %s18 = int_to_ptr.hbm [resolvable:$true] %s17
      %s19 = sshll.u32 [#allocation4], 4
      %s20 = int_to_ptr.vmem [resolvable:$true] %s19
      %22 = dma.hbm_to_vmem [thread:$0]  %s18, 128, %s20, [#allocation5]
    $region5: #{tpu_custom_call.1} parent=1 // pred_fallthru
      _
    // Predicated region
    $region6: #{tpu_custom_call.1} parent=1 // pred_check
      _
    $region7: #{tpu_custom_call.1} parent=1 // pred_check_branch
      %24 = sbr.rel (0) target = $region9
    $region8: #{tpu_custom_call.1} parent=1 // pred_region
      %26 = vsyncadd [#allocation8], 0
      %s28 = sshll.u32 %s2, 4
      %s29 = int_to_ptr.hbm [resolvable:$true] %s28
      %s30 = sshll.u32 [#allocation7], 4
      %s31 = int_to_ptr.vmem [resolvable:$true] %s30
      %33 = dma.hbm_to_vmem [thread:$0]  %s29, 128, %s31, [#allocation8]
    $region9: #{tpu_custom_call.1} parent=1 // pred_fallthru
      _
    // Predicated region
    $region10: #{tpu_custom_call.1} parent=1 // pred_check
      _
    $region11: #{tpu_custom_call.1} parent=1 // pred_check_branch
      %35 = sbr.rel (0) target = $region13
    $region12: #{tpu_custom_call.1} parent=1 // pred_region
      %37 = dma.done [#allocation5], 128
    $region13: #{tpu_custom_call.1} parent=1 // pred_fallthru
      _
    // Predicated region
    $region14: #{tpu_custom_call.1} parent=1 // pred_check
      _
    $region15: #{tpu_custom_call.1} parent=1 // pred_check_branch
      %39 = sbr.rel (0) target = $region17
    $region16: #{tpu_custom_call.1} parent=1 // pred_region
      %41 = dma.done [#allocation8], 128
    $region17: #{tpu_custom_call.1} parent=1 // pred_fallthru
      _
    %v42 = vld [vmem:[#allocation4] sm:$0xff]
    %v43 = vld [vmem:[#allocation7] sm:$0xff]
    %v44 = vadd.f32 %v42, %v43
    %45 = vst [vmem:[#allocation9] sm:$0xff] %v44
    // Predicated region
    $region18: #{tpu_custom_call.1} parent=1 // pred_check
      _
    $region19: #{tpu_custom_call.1} parent=1 // pred_check_branch
      %47 = sbr.rel (0) target = $region21
    $region20: #{tpu_custom_call.1} parent=1 // pred_region
      %49 = vsyncadd [#allocation6], 0
      %s51 = sshll.u32 [#allocation9], 4
      %s52 = int_to_ptr.vmem [resolvable:$true] %s51
      %s53 = sshll.u32 %s3, 4
      %s54 = int_to_ptr.hbm [resolvable:$true] %s53
      %56 = dma.vmem_to_hbm [thread:$0]  %s52, 128, %s54, [#allocation6]
    $region21: #{tpu_custom_call.1} parent=1 // pred_fallthru
      _
    // Predicated region
    $region22: #{tpu_custom_call.1} parent=1 // pred_check
      _
    $region23: #{tpu_custom_call.1} parent=1 // pred_check_branch
      %58 = sbr.rel (0) target = $region25
    $region24: #{tpu_custom_call.1} parent=1 // pred_region
      %60 = dma.done [#allocation6], 128
    $region25: #{tpu_custom_call.1} parent=1 // pred_fallthru
      _
    %61 = vsyncpa [#allocation5], 1
    %62 = vsyncpa [#allocation8], 1
    %63 = vsyncpa [#allocation6], 1

</llo_original>
